<compile_context>
chip_gen: v6e
topology: v6e:2x2x1
jax: 0.10.0
libtpu: 0.0.40
codegen_flags: <defaults>
</compile_context>

<pallas_src>
import functools

import jax
import jax.numpy as jnp
from jax.experimental import pallas as pl
from jax.experimental.pallas import tpu as pltpu


# ---------------------------------------------------------------------------
# Kernel: one (batch b, head h) grid step processes the full sequences.
# ---------------------------------------------------------------------------
def _cross_attention_kernel(x_ref, ctx_ref, wq_ref, bq_ref, wk_ref, bk_ref,
                            wv_ref, bv_ref, wo_ref, bo_ref, o_ref, acc_ref,
                            *, scale):
    h = pl.program_id(1)

    @pl.when(h == 0)
    def _():
        acc_ref[...] = jnp.zeros_like(acc_ref)

    x = x_ref[0]        # (Sq,  dim)
    ctx = ctx_ref[0]    # (Skv, dim)

    # Per-head projections: (S, dim) @ (dim, hd) -> (S, hd), f32 accumulate.
    q = jnp.dot(x, wq_ref[0], preferred_element_type=jnp.float32) + bq_ref[0]
    k = jnp.dot(ctx, wk_ref[0], preferred_element_type=jnp.float32) + bk_ref[0]
    v = jnp.dot(ctx, wv_ref[0], preferred_element_type=jnp.float32) + bv_ref[0]

    # Attention scores: contract head dim without an explicit transpose.
    dots = jax.lax.dot_general(
        q, k, (((1,), (1,)), ((), ())),
        preferred_element_type=jnp.float32) * scale          # (Sq, Skv)

    # Numerically stable softmax over keys.
    dots = dots - jnp.max(dots, axis=-1, keepdims=True)
    p = jnp.exp(dots)
    attn = p / jnp.sum(p, axis=-1, keepdims=True)

    out_h = jnp.dot(attn, v, preferred_element_type=jnp.float32)       # (Sq, hd)

    # Fused output projection: accumulate out_h @ Wo[h] over heads.
    acc_ref[...] += jnp.dot(out_h, wo_ref[0],
                            preferred_element_type=jnp.float32)        # (Sq, dim)

    @pl.when(h == pl.num_programs(1) - 1)
    def _():
        o_ref[0] = (acc_ref[...] + bo_ref[...]).astype(o_ref.dtype)


# ---------------------------------------------------------------------------
# Wrapper
# ---------------------------------------------------------------------------
@functools.partial(jax.jit, static_argnames=("heads",))
def cross_attention(x, context, params, *, heads: int):
    """x: (B, ..., dim), context: (B, ..., dim) -> (B, Sq, dim)."""
    B = x.shape[0]
    dim = x.shape[-1]
    assert context.shape[-1] == dim and dim % heads == 0
    hd = dim // heads
    scale = float(dim) ** (-0.5)      # NOTE: full dim, exactly like the torch module

    # `.view(batch, -1, dim)` from the PyTorch forward.
    xq = x.reshape(B, -1, dim)
    ctx = context.reshape(B, -1, dim)
    Sq = xq.shape[1]
    Skv = ctx.shape[1]

    # Pre-stack per-head weight slices (parameter-side glue, negligible cost).
    # Weights are stored (in, out) so y = x @ W + b  (== torch x @ W.T + b).
    wq, bq = params["wq"], params["bq"]                      # (dim, dim), (dim,)
    wkv, bkv = params["wkv"], params["bkv"]                  # (dim, 2*dim), (2*dim,)
    wo, bo = params["wo"], params["bo"]                      # (dim, dim), (dim,)

    wk, wv = wkv[:, :dim], wkv[:, dim:]
    bk, bv = bkv[:dim], bkv[dim:]

    def stack_in(w):   # (dim, dim) -> (H, dim, hd), column slice per head
        return w.reshape(dim, heads, hd).transpose(1, 0, 2)

    wq_h = stack_in(wq)
    wk_h = stack_in(wk)
    wv_h = stack_in(wv)
    wo_h = wo.reshape(heads, hd, dim)                        # row slice per head
    bq_h = bq.reshape(heads, 1, hd)
    bk_h = bk.reshape(heads, 1, hd)
    bv_h = bv.reshape(heads, 1, hd)
    bo_2d = bo.reshape(1, dim)

    kernel = functools.partial(_cross_attention_kernel, scale=scale)

    head_spec_w_in = pl.BlockSpec((1, dim, hd), lambda b, h: (h, 0, 0))
    head_spec_b = pl.BlockSpec((1, 1, hd), lambda b, h: (h, 0, 0))

    return pl.pallas_call(
        kernel,
        out_shape=jax.ShapeDtypeStruct((B, Sq, dim), x.dtype),
        grid=(B, heads),
        in_specs=[
            pl.BlockSpec((1, Sq, dim), lambda b, h: (b, 0, 0)),    # x
            pl.BlockSpec((1, Skv, dim), lambda b, h: (b, 0, 0)),   # context
            head_spec_w_in,                                        # Wq[h]
            head_spec_b,                                           # bq[h]
            head_spec_w_in,                                        # Wk[h]
            head_spec_b,                                           # bk[h]
            head_spec_w_in,                                        # Wv[h]
            head_spec_b,                                           # bv[h]
            pl.BlockSpec((1, hd, dim), lambda b, h: (h, 0, 0)),    # Wo[h]
            pl.BlockSpec((1, dim), lambda b, h: (0, 0)),           # bo
        ],
        out_specs=pl.BlockSpec((1, Sq, dim), lambda b, h: (b, 0, 0)),
        scratch_shapes=[pltpu.VMEM((Sq, dim), jnp.float32)],
        compiler_params=pltpu.CompilerParams(
            dimension_semantics=("parallel", "arbitrary")),
    )(xq, ctx, wq_h, bq_h, wk_h, bk_h, wv_h, bv_h, wo_h, bo_2d)


# ---------------------------------------------------------------------------
# Pure-JAX reference (mirrors the PyTorch forward exactly)
# ---------------------------------------------------------------------------
def cross_attention_ref(x, context, params, heads):
    B = x.shape[0]
    dim = x.shape[-1]
    hd = dim // heads
    xq = x.reshape(B, -1, dim)
    ctx = context.reshape(B, -1, dim)
    q = xq @ params["wq"] + params["bq"]
    kv = ctx @ params["wkv"] + params["bkv"]
    k, v = kv[..., :dim], kv[..., dim:]

    def split(t):
        return t.reshape(t.shape[0], t.shape[1], heads, hd).transpose(0, 2, 1, 3)

    qh, kh, vh = split(q), split(k), split(v)
    dots = jnp.einsum("bhqd,bhkd->bhqk", qh, kh) * (float(dim) ** -0.5)
    attn = jax.nn.softmax(dots, axis=-1)
    out = jnp.einsum("bhqk,bhkd->bhqd", attn, vh)
    out = out.transpose(0, 2, 1, 3).reshape(B, -1, dim)
    return out @ params["wo"] + params["bo"]


def init_params(key, dim):
    ks = jax.random.split(key, 6)
    s = 0.05
    return {
        "wq": jax.random.normal(ks[0], (dim, dim), jnp.float32) * s,
        "bq": jax.random.normal(ks[1], (dim,), jnp.float32) * s,
        "wkv": jax.random.normal(ks[2], (dim, 2 * dim), jnp.float32) * s,
        "bkv": jax.random.normal(ks[3], (2 * dim,), jnp.float32) * s,
        "wo": jax.random.normal(ks[4], (dim, dim), jnp.float32) * s,
        "bo": jax.random.normal(ks[5], (dim,), jnp.float32) * s,
    }


# ---------------------------------------------------------------------------
if __name__ == "__main__":
    key = jax.random.PRNGKey(0)
    k_x, k_c, k_p = jax.random.split(key, 3)

    B, dim, heads = 2, 32, 8
    # x arrives as a 4-D spatial feature map; the module's .view() flattens it.
    x = jax.random.normal(k_x, (B, 4, 4, dim), jnp.float32)       # -> Sq = 16
    context = jax.random.normal(k_c, (B, 8, dim), jnp.float32)    # Skv = 8
    params = init_params(k_p, dim)

    out = cross_attention(x, context, params, heads=heads)
    out = jax.block_until_ready(out)

    ref = cross_attention_ref(x, context, params, heads)
    assert out.shape == ref.shape == (B, 16, dim)
    assert bool(jnp.all(jnp.isfinite(out)))
    assert bool(jnp.allclose(out, ref, atol=2e-2, rtol=2e-2)), (
        f"max abs err {float(jnp.max(jnp.abs(out - ref)))}")
    print("KERNEL_OK")
</pallas_src>

<mosaic_0001>
module attributes {stable_mosaic.version = 11 : i64} {
  func.func @_cross_attention_kernel(%arg0: i32, %arg1: i32, %arg2: memref<1x16x32xf32, #tpu.memory_space<vmem>>, %arg3: memref<1x8x32xf32, #tpu.memory_space<vmem>>, %arg4: memref<1x32x4xf32, #tpu.memory_space<vmem>>, %arg5: memref<1x1x4xf32, #tpu.memory_space<vmem>>, %arg6: memref<1x32x4xf32, #tpu.memory_space<vmem>>, %arg7: memref<1x1x4xf32, #tpu.memory_space<vmem>>, %arg8: memref<1x32x4xf32, #tpu.memory_space<vmem>>, %arg9: memref<1x1x4xf32, #tpu.memory_space<vmem>>, %arg10: memref<1x4x32xf32, #tpu.memory_space<vmem>>, %arg11: memref<1x32xf32, #tpu.memory_space<vmem>>, %arg12: memref<1x16x32xf32, #tpu.memory_space<vmem>>, %arg13: memref<16x32xf32, #tpu.memory_space<vmem>>) attributes {dimension_semantics = [#tpu.dimension_semantics<parallel>, #tpu.dimension_semantics<arbitrary>], iteration_bounds = array<i64: 2, 8>, scalar_prefetch = 0 : i64, scratch_operands = 1 : i64, tpu.core_type = #tpu.core_type<tc>, window_params = [{transform_indices = @transform_0, window_bounds = array<i64: 1, 16, 32>}, {transform_indices = @transform_1, window_bounds = array<i64: 1, 8, 32>}, {transform_indices = @transform_2, window_bounds = array<i64: 1, 32, 4>}, {transform_indices = @transform_3, window_bounds = array<i64: 1, 1, 4>}, {transform_indices = @transform_4, window_bounds = array<i64: 1, 32, 4>}, {transform_indices = @transform_5, window_bounds = array<i64: 1, 1, 4>}, {transform_indices = @transform_6, window_bounds = array<i64: 1, 32, 4>}, {transform_indices = @transform_7, window_bounds = array<i64: 1, 1, 4>}, {transform_indices = @transform_8, window_bounds = array<i64: 1, 4, 32>}, {pipeline_mode = #tpu.pipeline_mode<synchronous>, transform_indices = @transform_9, window_bounds = array<i64: 1, 32>}, {transform_indices = @transform_10, window_bounds = array<i64: 1, 16, 32>}]} {
    %c0_i32 = arith.constant 0 : i32
    %0 = arith.cmpi eq, %arg1, %c0_i32 : i32
    %1 = arith.extui %0 : i1 to i32
    %c0_i32_0 = arith.constant 0 : i32
    %2 = arith.cmpi ne, %1, %c0_i32_0 : i32
    scf.if %2 {
      %cst_40 = arith.constant 0.000000e+00 : f32
      %50 = vector.broadcast %cst_40 : f32 to vector<16x32xf32>
      %c0_41 = arith.constant 0 : index
      %c0_42 = arith.constant 0 : index
      %51 = vector.load %arg13[%c0_41, %c0_42] : memref<16x32xf32, #tpu.memory_space<vmem>>, vector<16x32xf32>
      tpu.vector_store %arg13[%c0_41, %c0_42], %50 {strides = array<i32>} : memref<16x32xf32, #tpu.memory_space<vmem>>, vector<16x32xf32>,
    } else {
    }
    %c0 = arith.constant 0 : index
    %c0_1 = arith.constant 0 : index
    %c0_2 = arith.constant 0 : index
    %3 = vector.load %arg2[%c0, %c0_1, %c0_2] : memref<1x16x32xf32, #tpu.memory_space<vmem>>, vector<1x16x32xf32>
    %4 = vector.shape_cast %3 : vector<1x16x32xf32> to vector<16x32xf32>
    %c0_3 = arith.constant 0 : index
    %c0_4 = arith.constant 0 : index
    %c0_5 = arith.constant 0 : index
    %5 = vector.load %arg3[%c0_3, %c0_4, %c0_5] : memref<1x8x32xf32, #tpu.memory_space<vmem>>, vector<1x8x32xf32>
    %6 = vector.shape_cast %5 : vector<1x8x32xf32> to vector<8x32xf32>
    %c0_6 = arith.constant 0 : index
    %c0_7 = arith.constant 0 : index
    %c0_8 = arith.constant 0 : index
    %7 = vector.load %arg4[%c0_6, %c0_7, %c0_8] : memref<1x32x4xf32, #tpu.memory_space<vmem>>, vector<1x32x4xf32>
    %8 = vector.shape_cast %7 : vector<1x32x4xf32> to vector<32x4xf32>
    %cst = arith.constant dense<0.000000e+00> : vector<16x4xf32>
    %9 = tpu.matmul %4, %8, %cst {dimension_numbers = #tpu.dot_dimension_numbers<[1], [0], [0], [1], [0, 0, 1, 1], [], []>} : vector<16x32xf32>, vector<32x4xf32>, vector<16x4xf32> -> vector<16x4xf32>
    %c0_9 = arith.constant 0 : index
    %c0_10 = arith.constant 0 : index
    %c0_11 = arith.constant 0 : index
    %10 = vector.load %arg5[%c0_9, %c0_10, %c0_11] : memref<1x1x4xf32, #tpu.memory_space<vmem>>, vector<1x1x4xf32>
    %11 = vector.shape_cast %10 : vector<1x1x4xf32> to vector<1x4xf32>
    %12 = vector.broadcast %11 : vector<1x4xf32> to vector<16x4xf32>
    %13 = arith.addf %9, %12 : vector<16x4xf32>
    %c0_12 = arith.constant 0 : index
    %c0_13 = arith.constant 0 : index
    %c0_14 = arith.constant 0 : index
    %14 = vector.load %arg6[%c0_12, %c0_13, %c0_14] : memref<1x32x4xf32, #tpu.memory_space<vmem>>, vector<1x32x4xf32>
    %15 = vector.shape_cast %14 : vector<1x32x4xf32> to vector<32x4xf32>
    %cst_15 = arith.constant dense<0.000000e+00> : vector<8x4xf32>
    %16 = tpu.matmul %6, %15, %cst_15 {dimension_numbers = #tpu.dot_dimension_numbers<[1], [0], [0], [1], [0, 0, 1, 1], [], []>} : vector<8x32xf32>, vector<32x4xf32>, vector<8x4xf32> -> vector<8x4xf32>
    %c0_16 = arith.constant 0 : index
    %c0_17 = arith.constant 0 : index
    %c0_18 = arith.constant 0 : index
    %17 = vector.load %arg7[%c0_16, %c0_17, %c0_18] : memref<1x1x4xf32, #tpu.memory_space<vmem>>, vector<1x1x4xf32>
    %18 = vector.shape_cast %17 : vector<1x1x4xf32> to vector<1x4xf32>
    %19 = vector.broadcast %18 : vector<1x4xf32> to vector<8x4xf32>
    %20 = arith.addf %16, %19 : vector<8x4xf32>
    %c0_19 = arith.constant 0 : index
    %c0_20 = arith.constant 0 : index
    %c0_21 = arith.constant 0 : index
    %21 = vector.load %arg8[%c0_19, %c0_20, %c0_21] : memref<1x32x4xf32, #tpu.memory_space<vmem>>, vector<1x32x4xf32>
    %22 = vector.shape_cast %21 : vector<1x32x4xf32> to vector<32x4xf32>
    %cst_22 = arith.constant dense<0.000000e+00> : vector<8x4xf32>
    %23 = tpu.matmul %6, %22, %cst_22 {dimension_numbers = #tpu.dot_dimension_numbers<[1], [0], [0], [1], [0, 0, 1, 1], [], []>} : vector<8x32xf32>, vector<32x4xf32>, vector<8x4xf32> -> vector<8x4xf32>
    %c0_23 = arith.constant 0 : index
    %c0_24 = arith.constant 0 : index
    %c0_25 = arith.constant 0 : index
    %24 = vector.load %arg9[%c0_23, %c0_24, %c0_25] : memref<1x1x4xf32, #tpu.memory_space<vmem>>, vector<1x1x4xf32>
    %25 = vector.shape_cast %24 : vector<1x1x4xf32> to vector<1x4xf32>
    %26 = vector.broadcast %25 : vector<1x4xf32> to vector<8x4xf32>
    %27 = arith.addf %23, %26 : vector<8x4xf32>
    %cst_26 = arith.constant dense<0.000000e+00> : vector<16x8xf32>
    %28 = tpu.matmul %13, %20, %cst_26 {dimension_numbers = #tpu.dot_dimension_numbers<[1], [1], [0], [0], [0, 0, 1, 0], [], []>} : vector<16x4xf32>, vector<8x4xf32>, vector<16x8xf32> -> vector<16x8xf32>
    %cst_27 = arith.constant 0.176776692 : f32
    %29 = vector.broadcast %cst_27 : f32 to vector<16x8xf32>
    %30 = arith.mulf %28, %29 : vector<16x8xf32>
    %cst_28 = arith.constant dense<0xFF800000> : vector<16xf32>
    %31 = vector.multi_reduction <maximumf>, %30, %cst_28 [1] : vector<16x8xf32> to vector<16xf32>
    %32 = vector.shape_cast %31 : vector<16xf32> to vector<16x1xf32>
    %33 = vector.broadcast %32 : vector<16x1xf32> to vector<16x8xf32>
    %34 = arith.subf %30, %33 : vector<16x8xf32>
    %35 = math.exp %34 : vector<16x8xf32>
    %cst_29 = arith.constant dense<0.000000e+00> : vector<16xf32>
    %36 = vector.multi_reduction <add>, %35, %cst_29 [1] : vector<16x8xf32> to vector<16xf32>
    %37 = vector.shape_cast %36 : vector<16xf32> to vector<16x1xf32>
    %38 = vector.broadcast %37 : vector<16x1xf32> to vector<16x8xf32>
    %39 = arith.divf %35, %38 : vector<16x8xf32>
    %cst_30 = arith.constant dense<0.000000e+00> : vector<16x4xf32>
    %40 = tpu.matmul %39, %27, %cst_30 {dimension_numbers = #tpu.dot_dimension_numbers<[1], [0], [0], [1], [0, 0, 1, 1], [], []>} : vector<16x8xf32>, vector<8x4xf32>, vector<16x4xf32> -> vector<16x4xf32>
    %c0_31 = arith.constant 0 : index
    %c0_32 = arith.constant 0 : index
    %41 = vector.load %arg13[%c0_31, %c0_32] : memref<16x32xf32, #tpu.memory_space<vmem>>, vector<16x32xf32>
    %c0_33 = arith.constant 0 : index
    %c0_34 = arith.constant 0 : index
    %c0_35 = arith.constant 0 : index
    %42 = vector.load %arg10[%c0_33, %c0_34, %c0_35] : memref<1x4x32xf32, #tpu.memory_space<vmem>>, vector<1x4x32xf32>
    %43 = vector.shape_cast %42 : vector<1x4x32xf32> to vector<4x32xf32>
    %cst_36 = arith.constant dense<0.000000e+00> : vector<16x32xf32>
    %44 = tpu.matmul %40, %43, %cst_36 {dimension_numbers = #tpu.dot_dimension_numbers<[1], [0], [0], [1], [0, 0, 1, 1], [], []>} : vector<16x4xf32>, vector<4x32xf32>, vector<16x32xf32> -> vector<16x32xf32>
    %45 = arith.addf %41, %44 : vector<16x32xf32>
    %c0_37 = arith.constant 0 : index
    %c0_38 = arith.constant 0 : index
    %46 = vector.load %arg13[%c0_37, %c0_38] : memref<16x32xf32, #tpu.memory_space<vmem>>, vector<16x32xf32>
    tpu.vector_store %arg13[%c0_37, %c0_38], %45 {strides = array<i32>} : memref<16x32xf32, #tpu.memory_space<vmem>>, vector<16x32xf32>,
    %c7_i32 = arith.constant 7 : i32
    %47 = arith.cmpi eq, %arg1, %c7_i32 : i32
    %48 = arith.extui %47 : i1 to i32
    %c0_i32_39 = arith.constant 0 : i32
    %49 = arith.cmpi ne, %48, %c0_i32_39 : i32
    scf.if %49 {
      %c0_40 = arith.constant 0 : index
      %c0_41 = arith.constant 0 : index
      %50 = vector.load %arg13[%c0_40, %c0_41] : memref<16x32xf32, #tpu.memory_space<vmem>>, vector<16x32xf32>
      %c0_42 = arith.constant 0 : index
      %c0_43 = arith.constant 0 : index
      %51 = vector.load %arg11[%c0_42, %c0_43] : memref<1x32xf32, #tpu.memory_space<vmem>>, vector<1x32xf32>
      %52 = vector.broadcast %51 : vector<1x32xf32> to vector<16x32xf32>
      %53 = arith.addf %50, %52 : vector<16x32xf32>
      %c0_44 = arith.constant 0 : index
      %c0_45 = arith.constant 0 : index
      %c0_46 = arith.constant 0 : index
      %54 = vector.load %arg12[%c0_44, %c0_45, %c0_46] : memref<1x16x32xf32, #tpu.memory_space<vmem>>, vector<1x16x32xf32>
      %55 = vector.shape_cast %54 : vector<1x16x32xf32> to vector<16x32xf32>
      %56 = vector.shape_cast %53 : vector<16x32xf32> to vector<1x16x32xf32>
      tpu.vector_store %arg12[%c0_44, %c0_45, %c0_46], %56 {strides = array<i32>} : memref<1x16x32xf32, #tpu.memory_space<vmem>>, vector<1x16x32xf32>,
    } else {
    }
    return
  }
  func.func @transform_0(%arg0: i32, %arg1: i32) -> (i32, i32, i32) {
    %c0_i32 = arith.constant 0 : i32
    %c0_i32_0 = arith.constant 0 : i32
    %c0_i32_1 = arith.constant 0 : i32
    return %arg0, %c0_i32, %c0_i32_0 : i32, i32, i32
  }
  func.func @transform_1(%arg0: i32, %arg1: i32) -> (i32, i32, i32) {
    %c0_i32 = arith.constant 0 : i32
    %c0_i32_0 = arith.constant 0 : i32
    %c0_i32_1 = arith.constant 0 : i32
    return %arg0, %c0_i32, %c0_i32_0 : i32, i32, i32
  }
  func.func @transform_2(%arg0: i32, %arg1: i32) -> (i32, i32, i32) {
    %c0_i32 = arith.constant 0 : i32
    %c0_i32_0 = arith.constant 0 : i32
    %c0_i32_1 = arith.constant 0 : i32
    return %arg1, %c0_i32, %c0_i32_0 : i32, i32, i32
  }
  func.func @transform_3(%arg0: i32, %arg1: i32) -> (i32, i32, i32) {
    %c0_i32 = arith.constant 0 : i32
    %c0_i32_0 = arith.constant 0 : i32
    %c0_i32_1 = arith.constant 0 : i32
    return %arg1, %c0_i32, %c0_i32_0 : i32, i32, i32
  }
  func.func @transform_4(%arg0: i32, %arg1: i32) -> (i32, i32, i32) {
    %c0_i32 = arith.constant 0 : i32
    %c0_i32_0 = arith.constant 0 : i32
    %c0_i32_1 = arith.constant 0 : i32
    return %arg1, %c0_i32, %c0_i32_0 : i32, i32, i32
  }
  func.func @transform_5(%arg0: i32, %arg1: i32) -> (i32, i32, i32) {
    %c0_i32 = arith.constant 0 : i32
    %c0_i32_0 = arith.constant 0 : i32
    %c0_i32_1 = arith.constant 0 : i32
    return %arg1, %c0_i32, %c0_i32_0 : i32, i32, i32
  }
  func.func @transform_6(%arg0: i32, %arg1: i32) -> (i32, i32, i32) {
    %c0_i32 = arith.constant 0 : i32
    %c0_i32_0 = arith.constant 0 : i32
    %c0_i32_1 = arith.constant 0 : i32
    return %arg1, %c0_i32, %c0_i32_0 : i32, i32, i32
  }
  func.func @transform_7(%arg0: i32, %arg1: i32) -> (i32, i32, i32) {
    %c0_i32 = arith.constant 0 : i32
    %c0_i32_0 = arith.constant 0 : i32
    %c0_i32_1 = arith.constant 0 : i32
    return %arg1, %c0_i32, %c0_i32_0 : i32, i32, i32
  }
  func.func @transform_8(%arg0: i32, %arg1: i32) -> (i32, i32, i32) {
    %c0_i32 = arith.constant 0 : i32
    %c0_i32_0 = arith.constant 0 : i32
    %c0_i32_1 = arith.constant 0 : i32
    return %arg1, %c0_i32, %c0_i32_0 : i32, i32, i32
  }
  func.func @transform_9(%arg0: i32, %arg1: i32) -> (i32, i32) {
    %c0_i32 = arith.constant 0 : i32
    %c0_i32_0 = arith.constant 0 : i32
    %c0_i32_1 = arith.constant 0 : i32
    return %c0_i32, %c0_i32_0 : i32, i32
  }
  func.func @transform_10(%arg0: i32, %arg1: i32) -> (i32, i32, i32) {
    %c0_i32 = arith.constant 0 : i32
    %c0_i32_0 = arith.constant 0 : i32
    %c0_i32_1 = arith.constant 0 : i32
    return %arg0, %c0_i32, %c0_i32_0 : i32, i32, i32
  }
}

</mosaic_0001>

<llo_original>
// kernel: cross_attention.1
$region0: #{cross_attention.1}
  #allocation0 [shape = 'u32[]', space=smem, size = 0x4, offset = 0x4, fixed_abs, tag = 'smem constant byte address 0x4 - core index']
  #allocation1 [shape = 'u32[144,128]{1,0:T(1,128)}', space=vmem, size = 0x12000, scoped, tag = 'internal scratch']
  #allocation2 [shape = 'f32[16,32]{1,0:T(8,128)}', space=vmem, size = 0x2000, scoped, tag = 'scratch operand']
  %s0 = inlined_call_operand.vmem [shape: f32[2,16,32], index: 0, kind: input, shape index: {}]
  %s1 = inlined_call_operand.vmem [shape: f32[2,8,32], index: 1, kind: input, shape index: {}]
  %s2 = inlined_call_operand.vmem [shape: f32[8,32,4], index: 2, kind: input, shape index: {}]
  %s3 = inlined_call_operand.vmem [shape: f32[8,1,4], index: 3, kind: input, shape index: {}]
  %s4 = inlined_call_operand.vmem [shape: f32[8,32,4], index: 4, kind: input, shape index: {}]
  %s5 = inlined_call_operand.vmem [shape: f32[8,1,4], index: 5, kind: input, shape index: {}]
  %s6 = inlined_call_operand.vmem [shape: f32[8,32,4], index: 6, kind: input, shape index: {}]
  %s7 = inlined_call_operand.vmem [shape: f32[8,1,4], index: 7, kind: input, shape index: {}]
  %s8 = inlined_call_operand.vmem [shape: f32[8,4,32], index: 8, kind: input, shape index: {}]
  %s9 = inlined_call_operand.vmem [shape: f32[1,32], index: 9, kind: input, shape index: {}]
  %s10 = inlined_call_operand.hbm [shape: f32[2,16,32], index: 10, kind: output, shape index: {}]
  %s11 = sld [smem:[#allocation0]]
  $region81: #{cross_attention.1} parent=0
    _
  %s13 = ssub.s32 1, %s11
  %s14 = scalar_select 0, %s13, %s11
  $region1: #{cross_attention.1} parent=0
    #allocation3 [shape = 'u8[16384]{0}', space=vmem, size = 0x4000, scoped, tag = 'output window, operand 0']
    #allocation4 [shape = 's32[2]{0}', space=sflag, size = 0x8, scoped, tag = 'scoped memory for cross_attention.1']
    %15 = vsyncpa [#allocation4], 0
    %s16 = scalar_lea.sflag [#allocation4], 1
    %17 = vsyncpa %s16, 0
    loop: start=0, step=1, limit=18
    $region2: #{cross_attention.1} parent=1 // loop_pre_header
      _
    $region3: #{cross_attention.1} parent=1 // loop_header
      %s19 = sphi 0, %s23
      %p20 = scmp.ge.s32.totalorder %s19, 18
      %s26 = sphi 0, %s38
      %s27 = sphi 0, %s34
      %s28 = sphi 0, %s26
      %s29 = sphi 0, %s27
      %s30 = sphi 0, %s28
      %s31 = sphi 0, %s29
      %s41 = sphi 0, %s43
      %s44 = sphi 0, %s41
      %s45 = sphi 0, %s44
      %s61 = sphi 0, %s45
      %s67 = sphi 0, %s69
      %s70 = sphi 0, %s67
      %s71 = sphi 0, %s70
      %s87 = sphi 0, %s71
      %s93 = sphi 0, %s95
      %s96 = sphi 0, %s93
      %s97 = sphi 0, %s96
      %s113 = sphi 0, %s97
      %s119 = sphi 0, %s121
      %s122 = sphi 0, %s119
      %s123 = sphi 0, %s122
      %s139 = sphi 0, %s123
      %s145 = sphi 0, %s147
      %s148 = sphi 0, %s145
      %s149 = sphi 0, %s148
      %s165 = sphi 0, %s149
      %s171 = sphi 0, %s173
      %s174 = sphi 0, %s171
      %s175 = sphi 0, %s174
      %s191 = sphi 0, %s175
      %s197 = sphi 0, %s199
      %s200 = sphi 0, %s197
      %s201 = sphi 0, %s200
      %s217 = sphi 0, %s201
      %s223 = sphi 0, %s225
      %s226 = sphi 0, %s223
      %s227 = sphi 0, %s226
      %s243 = sphi 0, %s227
      %s249 = sphi 0, %s251
      %s252 = sphi 0, %s249
      %s253 = sphi 0, %s252
      %s269 = sphi 0, %s253
      %s273 = sphi 0, %s273
      %s275 = sphi 0, %s273
      %s276 = sphi 0, %s275
      %s290 = sphi 0, %s276
      %s296 = sphi 0, %s298
      %s299 = sphi 0, %s296
      %s300 = sphi 0, %s299
      %s316 = sphi 0, %s300
    $region4: #{cross_attention.1} parent=1 // loop_header_branch
      %22 = sbr.rel (%p20) target = $region8
    $region5: #{cross_attention.1} parent=1 // loop_body
      %s24 = ssub.s32 %s19, 1
      %s25 = ssub.s32 %s19, 2
      %s32 = sadd.s32 1, %s27
      %p33 = scmp.ge.s32.totalorder %s32, 8
      %s34 = scalar_select %p33, 0, %s32
      %s35 = sadd.s32 1, %s26
      %s36 = scalar_select %p33, %s35, %s26
      %p37 = scmp.ge.s32.totalorder %s36, 2
      %s38 = scalar_select %p37, 0, %s36
      %s39 = ssub.s32 %s26, %s38
      %p40 = scmp.eq.s32.totalorder %s39, 0
      %s42 = sadd.s32 %s41, 1
      %s43 = scalar_select %p40, %s41, %s42
      %p46 = pneg %p40
      %p47 = scmp.eq.s32.totalorder %s19, 15
      %p48 = por %p46, %p47
      %p49 = scmp.ne.s32.totalorder %s41, %s44
      %p50 = scmp.eq.s32.totalorder %s19, 0
      %p51 = por %p49, %p50
      %p52 = scmp.ne.s32.totalorder %s41, %s44
      %p53 = scmp.eq.s32.totalorder %s24, 15
      %p54 = por %p52, %p53
      %p55 = scmp.ne.s32.totalorder %s44, %s45
      %p56 = scmp.eq.s32.totalorder %s24, 0
      %p57 = por %p55, %p56
      %p58 = scmp.ne.s32.totalorder %s44, %s45
      %p59 = scmp.eq.s32.totalorder %s25, 15
      %p60 = por %p58, %p59
      %p62 = scmp.ne.s32.totalorder %s45, %s61
      %p63 = scmp.eq.s32.totalorder %s25, 0
      %p64 = por %p62, %p63
      %s65 = ssub.s32 %s26, %s38
      %p66 = scmp.eq.s32.totalorder %s65, 0
      %s68 = sadd.s32 %s67, 1
      %s69 = scalar_select %p66, %s67, %s68
      %p72 = pneg %p66
      %p73 = scmp.eq.s32.totalorder %s19, 15
      %p74 = por %p72, %p73
      %p75 = scmp.ne.s32.totalorder %s67, %s70
      %p76 = scmp.eq.s32.totalorder %s19, 0
      %p77 = por %p75, %p76
      %p78 = scmp.ne.s32.totalorder %s67, %s70
      %p79 = scmp.eq.s32.totalorder %s24, 15
      %p80 = por %p78, %p79
      %p81 = scmp.ne.s32.totalorder %s70, %s71
      %p82 = scmp.eq.s32.totalorder %s24, 0
      %p83 = por %p81, %p82
      %p84 = scmp.ne.s32.totalorder %s70, %s71
      %p85 = scmp.eq.s32.totalorder %s25, 15
      %p86 = por %p84, %p85
      %p88 = scmp.ne.s32.totalorder %s71, %s87
      %p89 = scmp.eq.s32.totalorder %s25, 0
      %p90 = por %p88, %p89
      %s91 = ssub.s32 %s27, %s34
      %p92 = scmp.eq.s32.totalorder %s91, 0
      %s94 = sadd.s32 %s93, 1
      %s95 = scalar_select %p92, %s93, %s94
      %p98 = pneg %p92
      %p99 = scmp.eq.s32.totalorder %s19, 15
      %p100 = por %p98, %p99
      %p101 = scmp.ne.s32.totalorder %s93, %s96
      %p102 = scmp.eq.s32.totalorder %s19, 0
      %p103 = por %p101, %p102
      %p104 = scmp.ne.s32.totalorder %s93, %s96
      %p105 = scmp.eq.s32.totalorder %s24, 15
      %p106 = por %p104, %p105
      %p107 = scmp.ne.s32.totalorder %s96, %s97
      %p108 = scmp.eq.s32.totalorder %s24, 0
      %p109 = por %p107, %p108
      %p110 = scmp.ne.s32.totalorder %s96, %s97
      %p111 = scmp.eq.s32.totalorder %s25, 15
      %p112 = por %p110, %p111
      %p114 = scmp.ne.s32.totalorder %s97, %s113
      %p115 = scmp.eq.s32.totalorder %s25, 0
      %p116 = por %p114, %p115
      %s117 = ssub.s32 %s27, %s34
      %p118 = scmp.eq.s32.totalorder %s117, 0
      %s120 = sadd.s32 %s119, 1
      %s121 = scalar_select %p118, %s119, %s120
      %p124 = pneg %p118
      %p125 = scmp.eq.s32.totalorder %s19, 15
      %p126 = por %p124, %p125
      %p127 = scmp.ne.s32.totalorder %s119, %s122
      %p128 = scmp.eq.s32.totalorder %s19, 0
      %p129 = por %p127, %p128
      %p130 = scmp.ne.s32.totalorder %s119, %s122
      %p131 = scmp.eq.s32.totalorder %s24, 15
      %p132 = por %p130, %p131
      %p133 = scmp.ne.s32.totalorder %s122, %s123
      %p134 = scmp.eq.s32.totalorder %s24, 0
      %p135 = por %p133, %p134
      %p136 = scmp.ne.s32.totalorder %s122, %s123
      %p137 = scmp.eq.s32.totalorder %s25, 15
      %p138 = por %p136, %p137
      %p140 = scmp.ne.s32.totalorder %s123, %s139
      %p141 = scmp.eq.s32.totalorder %s25, 0
      %p142 = por %p140, %p141
      %s143 = ssub.s32 %s27, %s34
      %p144 = scmp.eq.s32.totalorder %s143, 0
      %s146 = sadd.s32 %s145, 1
      %s147 = scalar_select %p144, %s145, %s146
      %p150 = pneg %p144
      %p151 = scmp.eq.s32.totalorder %s19, 15
      %p152 = por %p150, %p151
      %p153 = scmp.ne.s32.totalorder %s145, %s148
      %p154 = scmp.eq.s32.totalorder %s19, 0
      %p155 = por %p153, %p154
      %p156 = scmp.ne.s32.totalorder %s145, %s148
      %p157 = scmp.eq.s32.totalorder %s24, 15
      %p158 = por %p156, %p157
      %p159 = scmp.ne.s32.totalorder %s148, %s149
      %p160 = scmp.eq.s32.totalorder %s24, 0
      %p161 = por %p159, %p160
      %p162 = scmp.ne.s32.totalorder %s148, %s149
      %p163 = scmp.eq.s32.totalorder %s25, 15
      %p164 = por %p162, %p163
      %p166 = scmp.ne.s32.totalorder %s149, %s165
      %p167 = scmp.eq.s32.totalorder %s25, 0
      %p168 = por %p166, %p167
      %s169 = ssub.s32 %s27, %s34
      %p170 = scmp.eq.s32.totalorder %s169, 0
      %s172 = sadd.s32 %s171, 1
      %s173 = scalar_select %p170, %s171, %s172
      %p176 = pneg %p170
      %p177 = scmp.eq.s32.totalorder %s19, 15
      %p178 = por %p176, %p177
      %p179 = scmp.ne.s32.totalorder %s171, %s174
      %p180 = scmp.eq.s32.totalorder %s19, 0
      %p181 = por %p179, %p180
      %p182 = scmp.ne.s32.totalorder %s171, %s174
      %p183 = scmp.eq.s32.totalorder %s24, 15
      %p184 = por %p182, %p183
      %p185 = scmp.ne.s32.totalorder %s174, %s175
      %p186 = scmp.eq.s32.totalorder %s24, 0
      %p187 = por %p185, %p186
      %p188 = scmp.ne.s32.totalorder %s174, %s175
      %p189 = scmp.eq.s32.totalorder %s25, 15
      %p190 = por %p188, %p189
      %p192 = scmp.ne.s32.totalorder %s175, %s191
      %p193 = scmp.eq.s32.totalorder %s25, 0
      %p194 = por %p192, %p193
      %s195 = ssub.s32 %s27, %s34
      %p196 = scmp.eq.s32.totalorder %s195, 0
      %s198 = sadd.s32 %s197, 1
      %s199 = scalar_select %p196, %s197, %s198
      %p202 = pneg %p196
      %p203 = scmp.eq.s32.totalorder %s19, 15
      %p204 = por %p202, %p203
      %p205 = scmp.ne.s32.totalorder %s197, %s200
      %p206 = scmp.eq.s32.totalorder %s19, 0
      %p207 = por %p205, %p206
      %p208 = scmp.ne.s32.totalorder %s197, %s200
      %p209 = scmp.eq.s32.totalorder %s24, 15
      %p210 = por %p208, %p209
      %p211 = scmp.ne.s32.totalorder %s200, %s201
      %p212 = scmp.eq.s32.totalorder %s24, 0
      %p213 = por %p211, %p212
      %p214 = scmp.ne.s32.totalorder %s200, %s201
      %p215 = scmp.eq.s32.totalorder %s25, 15
      %p216 = por %p214, %p215
      %p218 = scmp.ne.s32.totalorder %s201, %s217
      %p219 = scmp.eq.s32.totalorder %s25, 0
      %p220 = por %p218, %p219
      %s221 = ssub.s32 %s27, %s34
      %p222 = scmp.eq.s32.totalorder %s221, 0
      %s224 = sadd.s32 %s223, 1
      %s225 = scalar_select %p222, %s223, %s224
      %p228 = pneg %p222
      %p229 = scmp.eq.s32.totalorder %s19, 15
      %p230 = por %p228, %p229
      %p231 = scmp.ne.s32.totalorder %s223, %s226
      %p232 = scmp.eq.s32.totalorder %s19, 0
      %p233 = por %p231, %p232
      %p234 = scmp.ne.s32.totalorder %s223, %s226
      %p235 = scmp.eq.s32.totalorder %s24, 15
      %p236 = por %p234, %p235
      %p237 = scmp.ne.s32.totalorder %s226, %s227
      %p238 = scmp.eq.s32.totalorder %s24, 0
      %p239 = por %p237, %p238
      %p240 = scmp.ne.s32.totalorder %s226, %s227
      %p241 = scmp.eq.s32.totalorder %s25, 15
      %p242 = por %p240, %p241
      %p244 = scmp.ne.s32.totalorder %s227, %s243
      %p245 = scmp.eq.s32.totalorder %s25, 0
      %p246 = por %p244, %p245
      %s247 = ssub.s32 %s27, %s34
      %p248 = scmp.eq.s32.totalorder %s247, 0
      %s250 = sadd.s32 %s249, 1
      %s251 = scalar_select %p248, %s249, %s250
      %p254 = pneg %p248
      %p255 = scmp.eq.s32.totalorder %s19, 15
      %p256 = por %p254, %p255
      %p257 = scmp.ne.s32.totalorder %s249, %s252
      %p258 = scmp.eq.s32.totalorder %s19, 0
      %p259 = por %p257, %p258
      %p260 = scmp.ne.s32.totalorder %s249, %s252
      %p261 = scmp.eq.s32.totalorder %s24, 15
      %p262 = por %p260, %p261
      %p263 = scmp.ne.s32.totalorder %s252, %s253
      %p264 = scmp.eq.s32.totalorder %s24, 0
      %p265 = por %p263, %p264
      %p266 = scmp.ne.s32.totalorder %s252, %s253
      %p267 = scmp.eq.s32.totalorder %s25, 15
      %p268 = por %p266, %p267
      %p270 = scmp.ne.s32.totalorder %s253, %s269
      %p271 = scmp.eq.s32.totalorder %s25, 0
      %p272 = por %p270, %p271
      %s274 = sadd.s32 %s273, 1
      %p277 = scmp.eq.s32.totalorder %s19, 15
      %p278 = scmp.ne.s32.totalorder %s273, %s275
      %p279 = scmp.eq.s32.totalorder %s19, 0
      %p280 = por %p278, %p279
      %p281 = scmp.ne.s32.totalorder %s273, %s275
      %p282 = scmp.eq.s32.totalorder %s24, 15
      %p283 = por %p281, %p282
      %p284 = scmp.ne.s32.totalorder %s275, %s276
      %p285 = scmp.eq.s32.totalorder %s24, 0
      %p286 = por %p284, %p285
      %p287 = scmp.ne.s32.totalorder %s275, %s276
      %p288 = scmp.eq.s32.totalorder %s25, 15
      %p289 = por %p287, %p288
      %p291 = scmp.ne.s32.totalorder %s276, %s290
      %p292 = scmp.eq.s32.totalorder %s25, 0
      %p293 = por %p291, %p292
      %s294 = ssub.s32 %s26, %s38
      %p295 = scmp.eq.s32.totalorder %s294, 0
      %s297 = sadd.s32 %s296, 1
      %s298 = scalar_select %p295, %s296, %s297
      %p301 = pneg %p295
      %p302 = scmp.eq.s32.totalorder %s19, 15
      %p303 = por %p301, %p302
      %p304 = scmp.ne.s32.totalorder %s296, %s299
      %p305 = scmp.eq.s32.totalorder %s19, 0
      %p306 = por %p304, %p305
      %p307 = scmp.ne.s32.totalorder %s296, %s299
      %p308 = scmp.eq.s32.totalorder %s24, 15
      %p309 = por %p307, %p308
      %p310 = scmp.ne.s32.totalorder %s299, %s300
      %p311 = scmp.eq.s32.totalorder %s24, 0
      %p312 = por %p310, %p311
      %p313 = scmp.ne.s32.totalorder %s299, %s300
      %p314 = scmp.eq.s32.totalorder %s25, 15
      %p315 = por %p313, %p314
      %p317 = scmp.ne.s32.totalorder %s300, %s316
      %p318 = scmp.eq.s32.totalorder %s25, 0
      %p319 = por %p317, %p318
      %p320 = scmp.le.s32.totalorder 1, %s19
      %p321 = scmp.lt.s32.totalorder %s19, 17
      %p322 = pnand %p320, %p321
      %p323 = pneg %p322
      // Predicated region
      $region9: #{cross_attention.1} parent=5 // pred_check
        _
      $region10: #{cross_attention.1} parent=5 // pred_check_branch
        %325 = sbr.rel (%p322) target = $region12
      $region11: #{cross_attention.1} parent=5 // pred_region
        %s326 = ssub.s32 %s19, 1
        // Predicated region
        $region13: #{cross_attention.1} parent=11 // pred_check
          %p327 = pneg %p286
        $region14: #{cross_attention.1} parent=11 // pred_check_branch
          %329 = sbr.rel (%p327) target = $region16
        $region15: #{cross_attention.1} parent=11 // pred_region
          _
        $region16: #{cross_attention.1} parent=11 // pred_fallthru
          _
      $region12: #{cross_attention.1} parent=5 // pred_fallthru
        _
      %p330 = scmp.lt.s32.totalorder %s19, 16
      // Predicated region
      $region17: #{cross_attention.1} parent=5 // pred_check
        %p331 = pneg %p330
      $region18: #{cross_attention.1} parent=5 // pred_check_branch
        %333 = sbr.rel (%p331) target = $region20
      $region19: #{cross_attention.1} parent=5 // pred_region
        // Predicated region
        $region21: #{cross_attention.1} parent=19 // pred_check
          %p334 = pneg %p51
        $region22: #{cross_attention.1} parent=19 // pred_check_branch
          %336 = sbr.rel (%p334) target = $region24
        $region23: #{cross_attention.1} parent=19 // pred_region
          %p337 = scmp.lt.s32.totalorder %s26, 1
          %s338 = scalar_select %p337, %s26, 1
          %s339 = smul.addr %s338, 2
          %s340 = smul.addr %s339, 8
          %s341 = scalar_lea.vmem %s0, %s340
        $region24: #{cross_attention.1} parent=19 // pred_fallthru
          _
        // Predicated region
        $region25: #{cross_attention.1} parent=19 // pred_check
          %p342 = pneg %p77
        $region26: #{cross_attention.1} parent=19 // pred_check_branch
          %344 = sbr.rel (%p342) target = $region28
        $region27: #{cross_attention.1} parent=19 // pred_region
          %p345 = scmp.lt.s32.totalorder %s26, 1
          %s346 = scalar_select %p345, %s26, 1
          %s347 = smul.addr %s346, 8
          %s348 = scalar_lea.vmem %s1, %s347
        $region28: #{cross_attention.1} parent=19 // pred_fallthru
          _
        // Predicated region
        $region29: #{cross_attention.1} parent=19 // pred_check
          %p349 = pneg %p103
        $region30: #{cross_attention.1} parent=19 // pred_check_branch
          %351 = sbr.rel (%p349) target = $region32
        $region31: #{cross_attention.1} parent=19 // pred_region
          %p352 = scmp.lt.s32.totalorder %s27, 7
          %s353 = scalar_select %p352, %s27, 7
          %s354 = smul.addr %s353, 4
          %s355 = smul.addr %s354, 8
          %s356 = scalar_lea.vmem %s2, %s355
        $region32: #{cross_attention.1} parent=19 // pred_fallthru
          _
        // Predicated region
        $region33: #{cross_attention.1} parent=19 // pred_check
          %p357 = pneg %p129
        $region34: #{cross_attention.1} parent=19 // pred_check_branch
          %359 = sbr.rel (%p357) target = $region36
        $region35: #{cross_attention.1} parent=19 // pred_region
          %p360 = scmp.lt.s32.totalorder %s27, 7
          %s361 = scalar_select %p360, %s27, 7
          %s362 = scalar_lea.vmem %s3, %s361
        $region36: #{cross_attention.1} parent=19 // pred_fallthru
          _
        // Predicated region
        $region37: #{cross_attention.1} parent=19 // pred_check
          %p363 = pneg %p155
        $region38: #{cross_attention.1} parent=19 // pred_check_branch
          %365 = sbr.rel (%p363) target = $region40
        $region39: #{cross_attention.1} parent=19 // pred_region
          %p366 = scmp.lt.s32.totalorder %s27, 7
          %s367 = scalar_select %p366, %s27, 7
          %s368 = smul.addr %s367, 4
          %s369 = smul.addr %s368, 8
          %s370 = scalar_lea.vmem %s4, %s369
        $region40: #{cross_attention.1} parent=19 // pred_fallthru
          _
        // Predicated region
        $region41: #{cross_attention.1} parent=19 // pred_check
          %p371 = pneg %p181
        $region42: #{cross_attention.1} parent=19 // pred_check_branch
          %373 = sbr.rel (%p371) target = $region44
        $region43: #{cross_attention.1} parent=19 // pred_region
          %p374 = scmp.lt.s32.totalorder %s27, 7
          %s375 = scalar_select %p374, %s27, 7
          %s376 = scalar_lea.vmem %s5, %s375
        $region44: #{cross_attention.1} parent=19 // pred_fallthru
          _
        // Predicated region
        $region45: #{cross_attention.1} parent=19 // pred_check
          %p377 = pneg %p207
        $region46: #{cross_attention.1} parent=19 // pred_check_branch
          %379 = sbr.rel (%p377) target = $region48
        $region47: #{cross_attention.1} parent=19 // pred_region
          %p380 = scmp.lt.s32.totalorder %s27, 7
          %s381 = scalar_select %p380, %s27, 7
          %s382 = smul.addr %s381, 4
          %s383 = smul.addr %s382, 8
          %s384 = scalar_lea.vmem %s6, %s383
        $region48: #{cross_attention.1} parent=19 // pred_fallthru
          _
        // Predicated region
        $region49: #{cross_attention.1} parent=19 // pred_check
          %p385 = pneg %p233
        $region50: #{cross_attention.1} parent=19 // pred_check_branch
          %387 = sbr.rel (%p385) target = $region52
        $region51: #{cross_attention.1} parent=19 // pred_region
          %p388 = scmp.lt.s32.totalorder %s27, 7
          %s389 = scalar_select %p388, %s27, 7
          %s390 = scalar_lea.vmem %s7, %s389
        $region52: #{cross_attention.1} parent=19 // pred_fallthru
          _
        // Predicated region
        $region53: #{cross_attention.1} parent=19 // pred_check
          %p391 = pneg %p259
        $region54: #{cross_attention.1} parent=19 // pred_check_branch
          %393 = sbr.rel (%p391) target = $region56
        $region55: #{cross_attention.1} parent=19 // pred_region
          %p394 = scmp.lt.s32.totalorder %s27, 7
          %s395 = scalar_select %p394, %s27, 7
          %s396 = smul.addr %s395, 4
          %s397 = scalar_lea.vmem %s8, %s396
        $region56: #{cross_attention.1} parent=19 // pred_fallthru
          _
      $region20: #{cross_attention.1} parent=5 // pred_fallthru
        _
      %p398 = scmp.le.s32.totalorder 1, %s19
      %p399 = scmp.lt.s32.totalorder %s19, 17
      %p400 = pnand %p398, %p399
      %p401 = pneg %p400
      // Predicated region
      $region57: #{cross_attention.1} parent=5 // pred_check
        _
      $region58: #{cross_attention.1} parent=5 // pred_check_branch
        %403 = sbr.rel (%p400) target = $region60
      $region59: #{cross_attention.1} parent=5 // pred_region
        %s404 = ssub.s32 %s19, 1
        %p405 = scmp.lt.s32.totalorder %s28, 1
        %s406 = scalar_select %p405, %s28, 1
        %s407 = smul.addr %s406, 2
        %s408 = smul.addr %s407, 8
        %s409 = scalar_lea.vmem %s0, %s408
        %p410 = pneg %p57
        %p411 = pneg %p54
        %p412 = scmp.lt.s32.totalorder %s28, 1
        %s413 = scalar_select %p412, %s28, 1
        %s414 = smul.addr %s413, 8
        %s415 = scalar_lea.vmem %s1, %s414
        %p416 = pneg %p83
        %p417 = pneg %p80
        %p418 = scmp.lt.s32.totalorder %s29, 7
        %s419 = scalar_select %p418, %s29, 7
        %s420 = smul.addr %s419, 4
        %s421 = smul.addr %s420, 8
        %s422 = scalar_lea.vmem %s2, %s421
        %p423 = pneg %p109
        %p424 = pneg %p106
        %p425 = scmp.lt.s32.totalorder %s29, 7
        %s426 = scalar_select %p425, %s29, 7
        %s427 = scalar_lea.vmem %s3, %s426
        %p428 = pneg %p135
        %p429 = pneg %p132
        %p430 = scmp.lt.s32.totalorder %s29, 7
        %s431 = scalar_select %p430, %s29, 7
        %s432 = smul.addr %s431, 4
        %s433 = smul.addr %s432, 8
        %s434 = scalar_lea.vmem %s4, %s433
        %p435 = pneg %p161
        %p436 = pneg %p158
        %p437 = scmp.lt.s32.totalorder %s29, 7
        %s438 = scalar_select %p437, %s29, 7
        %s439 = scalar_lea.vmem %s5, %s438
        %p440 = pneg %p187
        %p441 = pneg %p184
        %p442 = scmp.lt.s32.totalorder %s29, 7
        %s443 = scalar_select %p442, %s29, 7
        %s444 = smul.addr %s443, 4
        %s445 = smul.addr %s444, 8
        %s446 = scalar_lea.vmem %s6, %s445
        %p447 = pneg %p213
        %p448 = pneg %p210
        %p449 = scmp.lt.s32.totalorder %s29, 7
        %s450 = scalar_select %p449, %s29, 7
        %s451 = scalar_lea.vmem %s7, %s450
        %p452 = pneg %p239
        %p453 = pneg %p236
        %p454 = scmp.lt.s32.totalorder %s29, 7
        %s455 = scalar_select %p454, %s29, 7
        %s456 = smul.addr %s455, 4
        %s457 = scalar_lea.vmem %s8, %s456
        %p458 = pneg %p265
        %p459 = pneg %p262
        %p460 = pneg %p286
        %p461 = pneg %p283
        %p462 = pneg %p312
        %p463 = pneg %p309
        %s464 = sand.u32 %s299, 1
        %s465 = scalar_lea.sflag [#allocation4], %s464
        %s466 = sand.u32 %s299, 1
        %s467 = smul.addr %s466, 16
        %s468 = scalar_lea.vmem [#allocation3], %s467
        %p469 = scmp.lt.s32.totalorder %s28, 1
        %s470 = scalar_select %p469, %s28, 1
        %s471 = smul.addr %s470, 2
        %s472 = smul.addr %s471, 8
        %s473 = scalar_lea.vmem %s0, %s472
        %p474 = scmp.lt.s32.totalorder %s28, 1
        %s475 = scalar_select %p474, %s28, 1
        %s476 = smul.addr %s475, 8
        %s477 = scalar_lea.vmem %s1, %s476
        %p478 = scmp.lt.s32.totalorder %s29, 7
        %s479 = scalar_select %p478, %s29, 7
        %s480 = smul.addr %s479, 4
        %s481 = smul.addr %s480, 8
        %s482 = scalar_lea.vmem %s2, %s481
        %p483 = scmp.lt.s32.totalorder %s29, 7
        %s484 = scalar_select %p483, %s29, 7
        %s485 = scalar_lea.vmem %s3, %s484
        %p486 = scmp.lt.s32.totalorder %s29, 7
        %s487 = scalar_select %p486, %s29, 7
        %s488 = smul.addr %s487, 4
        %s489 = smul.addr %s488, 8
        %s490 = scalar_lea.vmem %s4, %s489
        %p491 = scmp.lt.s32.totalorder %s29, 7
        %s492 = scalar_select %p491, %s29, 7
        %s493 = scalar_lea.vmem %s5, %s492
        %p494 = scmp.lt.s32.totalorder %s29, 7
        %s495 = scalar_select %p494, %s29, 7
        %s496 = smul.addr %s495, 4
        %s497 = smul.addr %s496, 8
        %s498 = scalar_lea.vmem %s6, %s497
        %p499 = scmp.lt.s32.totalorder %s29, 7
        %s500 = scalar_select %p499, %s29, 7
        %s501 = scalar_lea.vmem %s7, %s500
        %p502 = scmp.lt.s32.totalorder %s29, 7
        %s503 = scalar_select %p502, %s29, 7
        %s504 = smul.addr %s503, 4
        %s505 = scalar_lea.vmem %s8, %s504
        %p506 = scmp.eq.s32.totalorder %s29, 0
        // Predicated region
        $region61: #{cross_attention.1} parent=59 // pred_check
          %p507 = pneg %p506
        $region62: #{cross_attention.1} parent=59 // pred_check_branch
          %509 = sbr.rel (%p507) target = $region64
        $region63: #{cross_attention.1} parent=59 // pred_region
          %vm510 = vcmask 261120
          %511 = vst.msk [vmem:[#allocation2] sm:$0xff] %vm510, 0.0
          %512 = vst.msk [vmem:[#allocation2 + $0x8] sm:$0xff] %vm510, 0.0
        $region64: #{cross_attention.1} parent=59 // pred_fallthru
          _
        %v513 = vld [vmem:[%s473] sm:$0xff]
        %v514 = vld [vmem:[%s473 + $0x8] sm:$0xff]
        %v515 = vld [vmem:[%s477] sm:$0xff]
        %v516 = vld [vmem:[%s482] sm:$0xff]
        %v517 = vld [vmem:[%s482 + $0x8] sm:$0xff]
        %v518 = vld [vmem:[%s482 + $0x10] sm:$0xff]
        %v519 = vld [vmem:[%s482 + $0x18] sm:$0xff]
        %v520 = vld [vmem:[%s485] sm:$0x1]
        %v522 = vlaneseq
        %v523 = vshrl.u32 %v522, 7
        %v524 = vsub.s32 0, %v523
        %v525 = vrot.slane %v520, %v524
        %vm527 = vcmask 261120
        %v529 = vsel %vm527, %v513, 0
        %v532 = vsel %vm527, %v514, 0
        %534 = vmatprep.subr.mxu0 0.0
        %535 = vmatpush1.msra.mxu0 0.0
        %536 = vmatprep.subr.mxu0 0.0
        %537 = vmatpush1.msra.mxu0 0.0
        %538 = vmatprep.subr.mxu0 0.0
        %539 = vmatpush1.msra.mxu0 0.0
        %540 = vmatprep.subr.mxu0 0.0
        %541 = vmatpush1.msra.mxu0 0.0
        %542 = vmatprep.subr.mxu0 0.0
        %543 = vmatpush1.msra.mxu0 0.0
        %544 = vmatprep.subr.mxu0 0.0
        %545 = vmatpush1.msra.mxu0 0.0
        %546 = vmatprep.subr.mxu0 0.0
        %547 = vmatpush1.msra.mxu0 0.0
        %548 = vmatprep.subr.mxu0 0.0
        %549 = vmatpush1.msra.mxu0 0.0
        %550 = vmatprep.subr.mxu0 0.0
        %551 = vmatpush1.msra.mxu0 0.0
        %552 = vmatprep.subr.mxu0 0.0
        %553 = vmatpush1.msra.mxu0 0.0
        %554 = vmatprep.subr.mxu0 0.0
        %555 = vmatpush1.msra.mxu0 0.0
        %556 = vmatprep.subr.mxu0 0.0
        %557 = vmatpush1.msra.mxu0 0.0
        %558 = vmatprep.subr.mxu0 0.0
        %559 = vmatpush1.msra.mxu0 %v519
        %560 = vmatprep.subr.mxu0 0.0
        %561 = vmatpush1.msra.mxu0 %v518
        %562 = vmatprep.subr.mxu0 0.0
        %563 = vmatpush1.msra.mxu0 %v517
        %564 = vmatprep.subr.mxu0 0.0
        %565 = vmatpush1.msra.mxu0 %v516
        %566 = vmatprep.subr.mxu0 0.0
        %567 = vmatpush2.msra.mxu0 0.0
        %568 = vmatprep.subr.mxu0 0.0
        %569 = vmatpush2.msra.mxu0 0.0
        %570 = vmatprep.subr.mxu0 0.0
        %571 = vmatpush2.msra.mxu0 0.0
        %572 = vmatprep.subr.mxu0 0.0
        %573 = vmatpush2.msra.mxu0 0.0
        %574 = vmatprep.subr.mxu0 0.0
        %575 = vmatpush2.msra.mxu0 0.0
        %576 = vmatprep.subr.mxu0 0.0
        %577 = vmatpush2.msra.mxu0 0.0
        %578 = vmatprep.subr.mxu0 0.0
        %579 = vmatpush2.msra.mxu0 0.0
        %580 = vmatprep.subr.mxu0 0.0
        %581 = vmatpush2.msra.mxu0 0.0
        %582 = vmatprep.subr.mxu0 0.0
        %583 = vmatpush2.msra.mxu0 0.0
        %584 = vmatprep.subr.mxu0 0.0
        %585 = vmatpush2.msra.mxu0 0.0
        %586 = vmatprep.subr.mxu0 0.0
        %587 = vmatpush2.msra.mxu0 0.0
        %588 = vmatprep.subr.mxu0 0.0
        %589 = vmatpush2.msra.mxu0 0.0
        %590 = vmatprep.subr.mxu0 0.0
        %591 = vmatpush2.msra.mxu0 0.0
        %592 = vmatprep.subr.mxu0 0.0
        %593 = vmatpush2.msra.mxu0 0.0
        %594 = vmatprep.subr.mxu0 0.0
        %595 = vmatpush2.msra.mxu0 0.0
        %596 = vmatprep.subr.mxu0 0.0
        %597 = vmatpush2.msra.mxu0 0.0
        %598 = vmatprep.mubr.f32.mxu0 0.0
        %599 = vmatmul.mubr.f32.gmra.mxu0 %v529
        %v600 = vpop.f32.mrf.mxu0
        %v601 = vadd.f32 %v525, %v600
        %v602 = vpop.f32.mrf.mxu0
        %603 = vmatprep.mubr.f32.mxu0 0.0
        %604 = vmatmul.mubr.f32.gmra.mxu0 %v532
        %v605 = vpop.f32.mrf.mxu0
        %v606 = vadd.f32 %v525, %v605
        %v607 = vpop.f32.mrf.mxu0
        %608 = vdwg.mxu0
        %v609 = vld [vmem:[%s490] sm:$0xff]
        %v610 = vld [vmem:[%s490 + $0x8] sm:$0xff]
        %v611 = vld [vmem:[%s490 + $0x10] sm:$0xff]
        %v612 = vld [vmem:[%s490 + $0x18] sm:$0xff]
        %v613 = vld [vmem:[%s493] sm:$0x1]
        %v615 = vlaneseq
        %v616 = vshrl.u32 %v615, 7
        %v617 = vsub.s32 0, %v616
        %v618 = vrot.slane %v613, %v617
        %v621 = vsel %vm527, %v515, 0
        %623 = vmatprep.subr.mxu0 0.0
        %624 = vmatpush1.msra.mxu0 0.0
        %625 = vmatprep.subr.mxu0 0.0
        %626 = vmatpush1.msra.mxu0 0.0
        %627 = vmatprep.subr.mxu0 0.0
        %628 = vmatpush1.msra.mxu0 0.0
        %629 = vmatprep.subr.mxu0 0.0
        %630 = vmatpush1.msra.mxu0 0.0
        %631 = vmatprep.subr.mxu0 0.0
        %632 = vmatpush1.msra.mxu0 0.0
        %633 = vmatprep.subr.mxu0 0.0
        %634 = vmatpush1.msra.mxu0 0.0
        %635 = vmatprep.subr.mxu0 0.0
        %636 = vmatpush1.msra.mxu0 0.0
        %637 = vmatprep.subr.mxu0 0.0
        %638 = vmatpush1.msra.mxu0 0.0
        %639 = vmatprep.subr.mxu0 0.0
        %640 = vmatpush1.msra.mxu0 0.0
        %641 = vmatprep.subr.mxu0 0.0
        %642 = vmatpush1.msra.mxu0 0.0
        %643 = vmatprep.subr.mxu0 0.0
        %644 = vmatpush1.msra.mxu0 0.0
        %645 = vmatprep.subr.mxu0 0.0
        %646 = vmatpush1.msra.mxu0 0.0
        %647 = vmatprep.subr.mxu0 0.0
        %648 = vmatpush1.msra.mxu0 %v612
        %649 = vmatprep.subr.mxu0 0.0
        %650 = vmatpush1.msra.mxu0 %v611
        %651 = vmatprep.subr.mxu0 0.0
        %652 = vmatpush1.msra.mxu0 %v610
        %653 = vmatprep.subr.mxu0 0.0
        %654 = vmatpush1.msra.mxu0 %v609
        %655 = vmatprep.subr.mxu0 0.0
        %656 = vmatpush2.msra.mxu0 0.0
        %657 = vmatprep.subr.mxu0 0.0
        %658 = vmatpush2.msra.mxu0 0.0
        %659 = vmatprep.subr.mxu0 0.0
        %660 = vmatpush2.msra.mxu0 0.0
        %661 = vmatprep.subr.mxu0 0.0
        %662 = vmatpush2.msra.mxu0 0.0
        %663 = vmatprep.subr.mxu0 0.0
        %664 = vmatpush2.msra.mxu0 0.0
        %665 = vmatprep.subr.mxu0 0.0
        %666 = vmatpush2.msra.mxu0 0.0
        %667 = vmatprep.subr.mxu0 0.0
        %668 = vmatpush2.msra.mxu0 0.0
        %669 = vmatprep.subr.mxu0 0.0
        %670 = vmatpush2.msra.mxu0 0.0
        %671 = vmatprep.subr.mxu0 0.0
        %672 = vmatpush2.msra.mxu0 0.0
        %673 = vmatprep.subr.mxu0 0.0
        %674 = vmatpush2.msra.mxu0 0.0
        %675 = vmatprep.subr.mxu0 0.0
        %676 = vmatpush2.msra.mxu0 0.0
        %677 = vmatprep.subr.mxu0 0.0
        %678 = vmatpush2.msra.mxu0 0.0
        %679 = vmatprep.subr.mxu0 0.0
        %680 = vmatpush2.msra.mxu0 0.0
        %681 = vmatprep.subr.mxu0 0.0
        %682 = vmatpush2.msra.mxu0 0.0
        %683 = vmatprep.subr.mxu0 0.0
        %684 = vmatpush2.msra.mxu0 0.0
        %685 = vmatprep.subr.mxu0 0.0
        %686 = vmatpush2.msra.mxu0 0.0
        %687 = vmatprep.mubr.f32.mxu0 0.0
        %688 = vmatmul.mubr.f32.gmra.mxu0 %v621
        %v689 = vpop.f32.mrf.mxu0
        %v690 = vadd.f32 %v618, %v689
        %v691 = vpop.f32.mrf.mxu0
        %692 = vdwg.mxu0
        %v693 = vld [vmem:[%s498] sm:$0xff]
        %v694 = vld [vmem:[%s498 + $0x8] sm:$0xff]
        %v695 = vld [vmem:[%s498 + $0x10] sm:$0xff]
        %v696 = vld [vmem:[%s498 + $0x18] sm:$0xff]
        %v697 = vld [vmem:[%s501] sm:$0x1]
        %v699 = vlaneseq
        %v700 = vshrl.u32 %v699, 7
        %v701 = vsub.s32 0, %v700
        %v702 = vrot.slane %v697, %v701
        %704 = vmatprep.subr.mxu0 0.0
        %705 = vmatpush1.msra.mxu0 0.0
        %706 = vmatprep.subr.mxu0 0.0
        %707 = vmatpush1.msra.mxu0 0.0
        %708 = vmatprep.subr.mxu0 0.0
        %709 = vmatpush1.msra.mxu0 0.0
        %710 = vmatprep.subr.mxu0 0.0
        %711 = vmatpush1.msra.mxu0 0.0
        %712 = vmatprep.subr.mxu0 0.0
        %713 = vmatpush1.msra.mxu0 0.0
        %714 = vmatprep.subr.mxu0 0.0
        %715 = vmatpush1.msra.mxu0 0.0
        %716 = vmatprep.subr.mxu0 0.0
        %717 = vmatpush1.msra.mxu0 0.0
        %718 = vmatprep.subr.mxu0 0.0
        %719 = vmatpush1.msra.mxu0 0.0
        %720 = vmatprep.subr.mxu0 0.0
        %721 = vmatpush1.msra.mxu0 0.0
        %722 = vmatprep.subr.mxu0 0.0
        %723 = vmatpush1.msra.mxu0 0.0
        %724 = vmatprep.subr.mxu0 0.0
        %725 = vmatpush1.msra.mxu0 0.0
        %726 = vmatprep.subr.mxu0 0.0
        %727 = vmatpush1.msra.mxu0 0.0
        %728 = vmatprep.subr.mxu0 0.0
        %729 = vmatpush1.msra.mxu0 %v696
        %730 = vmatprep.subr.mxu0 0.0
        %731 = vmatpush1.msra.mxu0 %v695
        %732 = vmatprep.subr.mxu0 0.0
        %733 = vmatpush1.msra.mxu0 %v694
        %734 = vmatprep.subr.mxu0 0.0
        %735 = vmatpush1.msra.mxu0 %v693
        %736 = vmatprep.subr.mxu0 0.0
        %737 = vmatpush2.msra.mxu0 0.0
        %738 = vmatprep.subr.mxu0 0.0
        %739 = vmatpush2.msra.mxu0 0.0
        %740 = vmatprep.subr.mxu0 0.0
        %741 = vmatpush2.msra.mxu0 0.0
        %742 = vmatprep.subr.mxu0 0.0
        %743 = vmatpush2.msra.mxu0 0.0
        %744 = vmatprep.subr.mxu0 0.0
        %745 = vmatpush2.msra.mxu0 0.0
        %746 = vmatprep.subr.mxu0 0.0
        %747 = vmatpush2.msra.mxu0 0.0
        %748 = vmatprep.subr.mxu0 0.0
        %749 = vmatpush2.msra.mxu0 0.0
        %750 = vmatprep.subr.mxu0 0.0
        %751 = vmatpush2.msra.mxu0 0.0
        %752 = vmatprep.subr.mxu0 0.0
        %753 = vmatpush2.msra.mxu0 0.0
        %754 = vmatprep.subr.mxu0 0.0
        %755 = vmatpush2.msra.mxu0 0.0
        %756 = vmatprep.subr.mxu0 0.0
        %757 = vmatpush2.msra.mxu0 0.0
        %758 = vmatprep.subr.mxu0 0.0
        %759 = vmatpush2.msra.mxu0 0.0
        %760 = vmatprep.subr.mxu0 0.0
        %761 = vmatpush2.msra.mxu0 0.0
        %762 = vmatprep.subr.mxu0 0.0
        %763 = vmatpush2.msra.mxu0 0.0
        %764 = vmatprep.subr.mxu0 0.0
        %765 = vmatpush2.msra.mxu0 0.0
        %766 = vmatprep.subr.mxu0 0.0
        %767 = vmatpush2.msra.mxu0 0.0
        %768 = vmatprep.mubr.f32.mxu0 0.0
        %769 = vmatmul.mubr.f32.gmra.mxu0 %v621
        %v770 = vpop.f32.mrf.mxu0
        %v771 = vadd.f32 %v702, %v770
        %v772 = vpop.f32.mrf.mxu0
        %773 = vdwg.mxu0
        %vm774 = vcmask 31744
        %v776 = vsel %vm774, %v601, 0
        %v779 = vsel %vm774, %v606, 0
        %v782 = vsel %vm774, %v690, 0
        %784 = vmatprep.subr.mxu0 0.0
        %785 = vmatpush1.xpose.msra.mxu0 0.0
        %786 = vmatprep.subr.mxu0 0.0
        %787 = vmatpush1.xpose.msra.mxu0 0.0
        %788 = vmatprep.subr.mxu0 0.0
        %789 = vmatpush1.xpose.msra.mxu0 0.0
        %790 = vmatprep.subr.mxu0 0.0
        %791 = vmatpush1.xpose.msra.mxu0 0.0
        %792 = vmatprep.subr.mxu0 0.0
        %793 = vmatpush1.xpose.msra.mxu0 0.0
        %794 = vmatprep.subr.mxu0 0.0
        %795 = vmatpush1.xpose.msra.mxu0 0.0
        %796 = vmatprep.subr.mxu0 0.0
        %797 = vmatpush1.xpose.msra.mxu0 0.0
        %798 = vmatprep.subr.mxu0 0.0
        %799 = vmatpush1.xpose.msra.mxu0 0.0
        %800 = vmatprep.subr.mxu0 0.0
        %801 = vmatpush1.xpose.msra.mxu0 0.0
        %802 = vmatprep.subr.mxu0 0.0
        %803 = vmatpush1.xpose.msra.mxu0 0.0
        %804 = vmatprep.subr.mxu0 0.0
        %805 = vmatpush1.xpose.msra.mxu0 0.0
        %806 = vmatprep.subr.mxu0 0.0
        %807 = vmatpush1.xpose.msra.mxu0 0.0
        %808 = vmatprep.subr.mxu0 0.0
        %809 = vmatpush1.xpose.msra.mxu0 0.0
        %810 = vmatprep.subr.mxu0 0.0
        %811 = vmatpush1.xpose.msra.mxu0 0.0
        %812 = vmatprep.subr.mxu0 0.0
        %813 = vmatpush1.xpose.msra.mxu0 0.0
        %814 = vmatprep.subr.mxu0 0.0
        %815 = vmatpush1.xpose.msra.mxu0 %v782
        %816 = vmatprep.subr.mxu0 0.0
        %817 = vmatpush2.xpose.msra.mxu0 0.0
        %818 = vmatprep.subr.mxu0 0.0
        %819 = vmatpush2.xpose.msra.mxu0 0.0
        %820 = vmatprep.subr.mxu0 0.0
        %821 = vmatpush2.xpose.msra.mxu0 0.0
        %822 = vmatprep.subr.mxu0 0.0
        %823 = vmatpush2.xpose.msra.mxu0 0.0
        %824 = vmatprep.subr.mxu0 0.0
        %825 = vmatpush2.xpose.msra.mxu0 0.0
        %826 = vmatprep.subr.mxu0 0.0
        %827 = vmatpush2.xpose.msra.mxu0 0.0
        %828 = vmatprep.subr.mxu0 0.0
        %829 = vmatpush2.xpose.msra.mxu0 0.0
        %830 = vmatprep.subr.mxu0 0.0
        %831 = vmatpush2.xpose.msra.mxu0 0.0
        %832 = vmatprep.subr.mxu0 0.0
        %833 = vmatpush2.xpose.msra.mxu0 0.0
        %834 = vmatprep.subr.mxu0 0.0
        %835 = vmatpush2.xpose.msra.mxu0 0.0
        %836 = vmatprep.subr.mxu0 0.0
        %837 = vmatpush2.xpose.msra.mxu0 0.0
        %838 = vmatprep.subr.mxu0 0.0
        %839 = vmatpush2.xpose.msra.mxu0 0.0
        %840 = vmatprep.subr.mxu0 0.0
        %841 = vmatpush2.xpose.msra.mxu0 0.0
        %842 = vmatprep.subr.mxu0 0.0
        %843 = vmatpush2.xpose.msra.mxu0 0.0
        %844 = vmatprep.subr.mxu0 0.0
        %845 = vmatpush2.xpose.msra.mxu0 0.0
        %846 = vmatprep.subr.mxu0 0.0
        %847 = vmatpush2.xpose.msra.mxu0 0.0
        %848 = vmatprep.mubr.f32.mxu0 0.0
        %849 = vmatmul.mubr.f32.gmra.mxu0 %v776
        %v850 = vpop.f32.mrf.mxu0
        %v851 = vadd.f32 0.0, %v850
        %v852 = vpop.f32.mrf.mxu0
        %853 = vmatprep.mubr.f32.mxu0 0.0
        %854 = vmatmul.mubr.f32.gmra.mxu0 %v779
        %v855 = vpop.f32.mrf.mxu0
        %v856 = vadd.f32 0.0, %v855
        %v857 = vpop.f32.mrf.mxu0
        %858 = vdwg.mxu0
        %v859 = vmul.f32 %v851, 0.17677669
        %v860 = vmul.f32 %v856, 0.17677669
        %vm861 = vcmask 64512
        %v862 = vsel %vm861, %v859, -inf
        %863 = vmax.xlane.f32.xlu0 %v862
        %v864 = vpop.xlane.xlu0 %863
        %v865 = vsel %vm861, %v860, -inf
        %866 = vmax.xlane.f32.xlu0 %v865
        %v867 = vpop.xlane.xlu0 %866
        %v868 = vsub.f32 %v859, %v864
        %v869 = vsub.f32 %v860, %v867
        %v870 = vmul.f32 %v868, 1.442695
        %v871 = vpow.pop %v870
        %v872 = vmul.f32 %v869, 1.442695
        %v873 = vpow.pop %v872
        %v874 = vsel %vm861, %v871, 0.0
        %875 = vadd.xlane.f32.xlu0 %v874
        %v876 = vpop.xlane.xlu0 %875
        %v877 = vsel %vm861, %v873, 0.0
        %878 = vadd.xlane.f32.xlu0 %v877
        %v879 = vpop.xlane.xlu0 %878
        %v880 = vrcp.pop %v876
        %v881 = vmul.f32 %v871, %v880
        %v882 = vrcp.pop %v879
        %v883 = vmul.f32 %v873, %v882
        %v885 = vsel %vm861, %v881, 0
        %v888 = vsel %vm861, %v883, 0
        %890 = vmatprep.subr.mxu0 0.0
        %891 = vmatpush1.msra.mxu0 0.0
        %892 = vmatprep.subr.mxu0 0.0
        %893 = vmatpush1.msra.mxu0 0.0
        %894 = vmatprep.subr.mxu0 0.0
        %895 = vmatpush1.msra.mxu0 0.0
        %896 = vmatprep.subr.mxu0 0.0
        %897 = vmatpush1.msra.mxu0 0.0
        %898 = vmatprep.subr.mxu0 0.0
        %899 = vmatpush1.msra.mxu0 0.0
        %900 = vmatprep.subr.mxu0 0.0
        %901 = vmatpush1.msra.mxu0 0.0
        %902 = vmatprep.subr.mxu0 0.0
        %903 = vmatpush1.msra.mxu0 0.0
        %904 = vmatprep.subr.mxu0 0.0
        %905 = vmatpush1.msra.mxu0 0.0
        %906 = vmatprep.subr.mxu0 0.0
        %907 = vmatpush1.msra.mxu0 0.0
        %908 = vmatprep.subr.mxu0 0.0
        %909 = vmatpush1.msra.mxu0 0.0
        %910 = vmatprep.subr.mxu0 0.0
        %911 = vmatpush1.msra.mxu0 0.0
        %912 = vmatprep.subr.mxu0 0.0
        %913 = vmatpush1.msra.mxu0 0.0
        %914 = vmatprep.subr.mxu0 0.0
        %915 = vmatpush1.msra.mxu0 0.0
        %916 = vmatprep.subr.mxu0 0.0
        %917 = vmatpush1.msra.mxu0 0.0
        %918 = vmatprep.subr.mxu0 0.0
        %919 = vmatpush1.msra.mxu0 0.0
        %920 = vmatprep.subr.mxu0 0.0
        %921 = vmatpush1.msra.mxu0 %v771
        %922 = vmatprep.subr.mxu0 0.0
        %923 = vmatpush2.msra.mxu0 0.0
        %924 = vmatprep.subr.mxu0 0.0
        %925 = vmatpush2.msra.mxu0 0.0
        %926 = vmatprep.subr.mxu0 0.0
        %927 = vmatpush2.msra.mxu0 0.0
        %928 = vmatprep.subr.mxu0 0.0
        %929 = vmatpush2.msra.mxu0 0.0
        %930 = vmatprep.subr.mxu0 0.0
        %931 = vmatpush2.msra.mxu0 0.0
        %932 = vmatprep.subr.mxu0 0.0
        %933 = vmatpush2.msra.mxu0 0.0
        %934 = vmatprep.subr.mxu0 0.0
        %935 = vmatpush2.msra.mxu0 0.0
        %936 = vmatprep.subr.mxu0 0.0
        %937 = vmatpush2.msra.mxu0 0.0
        %938 = vmatprep.subr.mxu0 0.0
        %939 = vmatpush2.msra.mxu0 0.0
        %940 = vmatprep.subr.mxu0 0.0
        %941 = vmatpush2.msra.mxu0 0.0
        %942 = vmatprep.subr.mxu0 0.0
        %943 = vmatpush2.msra.mxu0 0.0
        %944 = vmatprep.subr.mxu0 0.0
        %945 = vmatpush2.msra.mxu0 0.0
        %946 = vmatprep.subr.mxu0 0.0
        %947 = vmatpush2.msra.mxu0 0.0
        %948 = vmatprep.subr.mxu0 0.0
        %949 = vmatpush2.msra.mxu0 0.0
        %950 = vmatprep.subr.mxu0 0.0
        %951 = vmatpush2.msra.mxu0 0.0
        %952 = vmatprep.subr.mxu0 0.0
        %953 = vmatpush2.msra.mxu0 0.0
        %954 = vmatprep.mubr.f32.mxu0 0.0
        %955 = vmatmul.mubr.f32.gmra.mxu0 %v885
        %v956 = vpop.f32.mrf.mxu0
        %v957 = vadd.f32 0.0, %v956
        %v958 = vpop.f32.mrf.mxu0
        %959 = vmatprep.mubr.f32.mxu0 0.0
        %960 = vmatmul.mubr.f32.gmra.mxu0 %v888
        %v961 = vpop.f32.mrf.mxu0
        %v962 = vadd.f32 0.0, %v961
        %v963 = vpop.f32.mrf.mxu0
        %964 = vdwg.mxu0
        %v965 = vld [vmem:[#allocation2] sm:$0xff]
        %v966 = vld [vmem:[#allocation2 + $0x8] sm:$0xff]
        %v967 = vld [vmem:[%s505] sm:$0xf]
        %v969 = vsel %vm774, %v957, 0
        %v972 = vsel %vm774, %v962, 0
        %vm974 = vcmask 1043456
        %v976 = vsel %vm974, %v967, 0
        %978 = vmatprep.subr.mxu0 0.0
        %979 = vmatpush1.msra.mxu0 0.0
        %980 = vmatprep.subr.mxu0 0.0
        %981 = vmatpush1.msra.mxu0 0.0
        %982 = vmatprep.subr.mxu0 0.0
        %983 = vmatpush1.msra.mxu0 0.0
        %984 = vmatprep.subr.mxu0 0.0
        %985 = vmatpush1.msra.mxu0 0.0
        %986 = vmatprep.subr.mxu0 0.0
        %987 = vmatpush1.msra.mxu0 0.0
        %988 = vmatprep.subr.mxu0 0.0
        %989 = vmatpush1.msra.mxu0 0.0
        %990 = vmatprep.subr.mxu0 0.0
        %991 = vmatpush1.msra.mxu0 0.0
        %992 = vmatprep.subr.mxu0 0.0
        %993 = vmatpush1.msra.mxu0 0.0
        %994 = vmatprep.subr.mxu0 0.0
        %995 = vmatpush1.msra.mxu0 0.0
        %996 = vmatprep.subr.mxu0 0.0
        %997 = vmatpush1.msra.mxu0 0.0
        %998 = vmatprep.subr.mxu0 0.0
        %999 = vmatpush1.msra.mxu0 0.0
        %1000 = vmatprep.subr.mxu0 0.0
        %1001 = vmatpush1.msra.mxu0 0.0
        %1002 = vmatprep.subr.mxu0 0.0
        %1003 = vmatpush1.msra.mxu0 0.0
        %1004 = vmatprep.subr.mxu0 0.0
        %1005 = vmatpush1.msra.mxu0 0.0
        %1006 = vmatprep.subr.mxu0 0.0
        %1007 = vmatpush1.msra.mxu0 0.0
        %1008 = vmatprep.subr.mxu0 0.0
        %1009 = vmatpush1.msra.mxu0 %v976
        %1010 = vmatprep.subr.mxu0 0.0
        %1011 = vmatpush2.msra.mxu0 0.0
        %1012 = vmatprep.subr.mxu0 0.0
        %1013 = vmatpush2.msra.mxu0 0.0
        %1014 = vmatprep.subr.mxu0 0.0
        %1015 = vmatpush2.msra.mxu0 0.0
        %1016 = vmatprep.subr.mxu0 0.0
        %1017 = vmatpush2.msra.mxu0 0.0
        %1018 = vmatprep.subr.mxu0 0.0
        %1019 = vmatpush2.msra.mxu0 0.0
        %1020 = vmatprep.subr.mxu0 0.0
        %1021 = vmatpush2.msra.mxu0 0.0
        %1022 = vmatprep.subr.mxu0 0.0
        %1023 = vmatpush2.msra.mxu0 0.0
        %1024 = vmatprep.subr.mxu0 0.0
        %1025 = vmatpush2.msra.mxu0 0.0
        %1026 = vmatprep.subr.mxu0 0.0
        %1027 = vmatpush2.msra.mxu0 0.0
        %1028 = vmatprep.subr.mxu0 0.0
        %1029 = vmatpush2.msra.mxu0 0.0
        %1030 = vmatprep.subr.mxu0 0.0
        %1031 = vmatpush2.msra.mxu0 0.0
        %1032 = vmatprep.subr.mxu0 0.0
        %1033 = vmatpush2.msra.mxu0 0.0
        %1034 = vmatprep.subr.mxu0 0.0
        %1035 = vmatpush2.msra.mxu0 0.0
        %1036 = vmatprep.subr.mxu0 0.0
        %1037 = vmatpush2.msra.mxu0 0.0
        %1038 = vmatprep.subr.mxu0 0.0
        %1039 = vmatpush2.msra.mxu0 0.0
        %1040 = vmatprep.subr.mxu0 0.0
        %1041 = vmatpush2.msra.mxu0 0.0
        %1042 = vmatprep.mubr.f32.mxu0 0.0
        %1043 = vmatmul.mubr.f32.gmra.mxu0 %v969
        %v1044 = vpop.f32.mrf.mxu0
        %v1045 = vadd.f32 0.0, %v1044
        %v1046 = vpop.f32.mrf.mxu0
        %1047 = vmatprep.mubr.f32.mxu0 0.0
        %1048 = vmatmul.mubr.f32.gmra.mxu0 %v972
        %v1049 = vpop.f32.mrf.mxu0
        %v1050 = vadd.f32 0.0, %v1049
        %v1051 = vpop.f32.mrf.mxu0
        %1052 = vdwg.mxu0
        %v1053 = vadd.f32 %v965, %v1045
        %v1054 = vadd.f32 %v966, %v1050
        %1055 = vst.msk [vmem:[#allocation2] sm:$0xff] %vm527, %v1053
        %1056 = vst.msk [vmem:[#allocation2 + $0x8] sm:$0xff] %vm527, %v1054
        %p1057 = scmp.eq.s32.totalorder %s29, 7
        // Predicated region
        $region65: #{cross_attention.1} parent=59 // pred_check
          %p1058 = pneg %p1057
        $region66: #{cross_attention.1} parent=59 // pred_check_branch
          %1060 = sbr.rel (%p1058) target = $region68
        $region67: #{cross_attention.1} parent=59 // pred_region
          %v1061 = vld [vmem:[#allocation2] sm:$0xff]
          %v1062 = vld [vmem:[#allocation2 + $0x8] sm:$0xff]
          %v1063 = vld [vmem:[%s9] sm:$0x1]
          %v1065 = vlaneseq
          %v1066 = vshrl.u32 %v1065, 7
          %v1067 = vsub.s32 0, %v1066
          %v1068 = vrot.slane %v1063, %v1067
          %v1070 = vadd.f32 %v1061, %v1068
          %v1071 = vadd.f32 %v1062, %v1068
          %1072 = vst.msk [vmem:[%s468] sm:$0xff] %vm527, %v1070
          %1073 = vst.msk [vmem:[%s468 + $0x8] sm:$0xff] %vm527, %v1071
        $region68: #{cross_attention.1} parent=59 // pred_fallthru
          _
        %s1074 = sand.u32 %s299, 1
        %s1075 = scalar_lea.sflag [#allocation4], %s1074
        %s1076 = sand.u32 %s299, 1
        %s1077 = smul.addr %s1076, 16
        %s1078 = scalar_lea.vmem [#allocation3], %s1077
        // Predicated region
        $region69: #{cross_attention.1} parent=59 // pred_check
          %p1079 = pneg %p309
        $region70: #{cross_attention.1} parent=59 // pred_check_branch
          %1081 = sbr.rel (%p1079) target = $region72
        $region71: #{cross_attention.1} parent=59 // pred_region
          %s1083 = ssub.s32 256, 256
          %1084 = vsyncadd %s1075, %s1083
          %s1085 = smul.addr %s28, 2
          %s1086 = smul.addr %s1085, 128
          %s1087 = scalar_lea.hbm %s10, %s1086
          %s1088 = sshll.u32 %s1078, 4
          %s1089 = int_to_ptr.vmem [resolvable:$true] %s1088
          %1094 = dma.vmem_to_hbm [thread:$0]  %s1089, 256, %s1087, %s1075, 128, 128, 8
        $region72: #{cross_attention.1} parent=59 // pred_fallthru
          _
      $region60: #{cross_attention.1} parent=5 // pred_fallthru
        _
      %p1095 = scmp.le.s32.totalorder 2, %s19
      // Predicated region
      $region73: #{cross_attention.1} parent=5 // pred_check
        %p1096 = pneg %p1095
      $region74: #{cross_attention.1} parent=5 // pred_check_branch
        %1098 = sbr.rel (%p1096) target = $region76
      $region75: #{cross_attention.1} parent=5 // pred_region
        %s1099 = ssub.s32 %s19, 2
        // Predicated region
        $region77: #{cross_attention.1} parent=75 // pred_check
          %p1100 = pneg %p315
        $region78: #{cross_attention.1} parent=75 // pred_check_branch
          %1102 = sbr.rel (%p1100) target = $region80
        $region79: #{cross_attention.1} parent=75 // pred_region
          %s1103 = sand.u32 %s300, 1
          %s1104 = scalar_lea.sflag [#allocation4], %s1103
          %s1105 = sand.u32 %s300, 1
          %s1106 = smul.addr %s1105, 16
          %s1107 = scalar_lea.vmem [#allocation3], %s1106
          %1108 = dma.done %s1104, 256
        $region80: #{cross_attention.1} parent=75 // pred_fallthru
          _
      $region76: #{cross_attention.1} parent=5 // pred_fallthru
        _
    $region6: #{cross_attention.1} parent=1 // loop_footer
      %s23 = sadd.s32 1, %s19
    $region7: #{cross_attention.1} parent=1 // loop_footer_branch
      %18 = sbr.rel target = $region3
    $region8: #{cross_attention.1} parent=1 // loop_exit
      _
    %1109 = vsyncpa [#allocation4], 1
    %s1110 = scalar_lea.sflag [#allocation4], 1
    %1111 = vsyncpa %s1110, 1

</llo_original>
